<compile_context>
chip_gen: v7x
topology: tpu7x:2x2x1
jax: 0.10.0
libtpu: 0.0.40
codegen_flags: <defaults>
</compile_context>

<pallas_src>
import jax
import jax.numpy as jnp
from jax.experimental import pallas as pl
from jax.experimental.pallas import tpu as pltpu


def patch_embed_kernel(p_ref, w_ref, addend_ref, o_ref):
    """One grid step: TB batch elements, one GEMM.

    p_ref:      (TB, N_pad, K)  bf16 im2col rows; row 0 = zeros (cls slot),
                                rows 1..N = patches, rows N+1.. = zero padding.
    w_ref:      (K, E)          bf16 flattened conv weight (resident).
    addend_ref: (N_pad, E)      f32  row 0 = cls_token + positions[0],
                                rows 1..N = positions[1:] + conv bias.
    o_ref:      (TB, N+1, E)    output tokens (row 0 = cls, rows 1..N = patches).
    """
    tb, n_pad, k = p_ref.shape
    _, n_tok, e = o_ref.shape                       # n_tok = N + 1

    w = w_ref[...]                                  # resident bf16 weight
    addend = addend_ref[...]                        # resident f32 addend

    # Single large-M GEMM on the MXU: (TB*N_pad, K) x (K, E) -> f32.
    p = p_ref[...].reshape(tb * n_pad, k)
    acc = jnp.dot(p, w, preferred_element_type=jnp.float32)

    # f32 epilogue (bias/positions/cls already folded into addend), then one
    # aligned, offset-0 store of the whole (TB, N+1, E) block.
    acc = acc.reshape(tb, n_pad, e) + addend[None, :, :]
    o_ref[...] = acc[:, :n_tok, :].astype(o_ref.dtype)


def _vmem_bytes(tb, n_pad, n_tok, K, E, out_itemsize, resident_buffers):
    """Rough VMEM footprint estimate for one pipeline configuration."""
    resident = resident_buffers * (K * E * 2 + n_pad * E * 4)   # weight + addend
    per_step = (2 * tb * n_pad * K * 2                 # double-buffered bf16 patches
                + 2 * tb * n_tok * E * out_itemsize    # double-buffered output
                + tb * n_pad * E * 4)                  # f32 GEMM accumulator
    return resident + per_step


def _pick_batch_tile(B, n_pad, n_tok, K, E, out_itemsize,
                     budget_bytes=40 * 1024 * 1024, cap=32):
    """Largest divisor of B (<= cap) fitting the VMEM budget, preferring an
    even number of grid steps (v7x: two TensorCores share the parallel axis)."""
    fitting = [
        tb for tb in range(1, min(B, cap) + 1)
        if B % tb == 0
        and _vmem_bytes(tb, n_pad, n_tok, K, E, out_itemsize, 1) <= budget_bytes
    ]
    if not fitting:
        return 1
    even_steps = [tb for tb in fitting if (B // tb) % 2 == 0]
    pool = even_steps if even_steps else fitting
    return max(pool)
    # TODO(synk): when B has no good divisor (e.g. prime), a remainder tile /
    # batch padding would avoid degenerating to many tiny steps.


def patch_embedding_forward(x, conv_w, conv_b, cls_token, positions, patch_size,
                            dropout_p=0.0, out_dtype=None):
    """x: (B, C, H, W). Returns (B, N+1, E), matching the PyTorch module."""
    B, C, H, W = x.shape
    P = patch_size
    E = conv_w.shape[0]
    hN, wN = H // P, W // P
    N = hN * wN
    K = C * P * P
    n_tok = N + 1
    n_pad = ((n_tok + 7) // 8) * 8          # sublane-aligned token-row count

    # --- glue: im2col for a stride==kernel conv ----------------------------
    # Cast to bf16 BEFORE the reorder so that pass moves half the bytes; then
    # prepend one zero "cls" row and pad the tail to n_pad rows so the kernel's
    # reshape is sublane-clean and its store is a full offset-0 block store.
    pat = x.astype(jnp.bfloat16).reshape(B, C, hN, P, wN, P)
    pat = pat.transpose(0, 2, 4, 1, 3, 5).reshape(B, N, K)      # (c, kh, kw) order
    patches = jnp.pad(pat, ((0, 0), (1, n_pad - n_tok), (0, 0)))
    # TODO(synk): with an NHWC-native input layout (or an in-kernel DMA patch
    # gather over (b, patch-row) grid axes) this host-side reorder pass over
    # the activations disappears entirely.

    w_mat = conv_w.reshape(E, K).T.astype(jnp.bfloat16)          # (K, E)

    addend = jnp.zeros((n_pad, E), jnp.float32)
    addend = addend.at[0, :].set(
        cls_token.reshape(E).astype(jnp.float32) + positions[0].astype(jnp.float32))
    addend = addend.at[1:n_tok, :].set(
        positions[1:].astype(jnp.float32) + conv_b.astype(jnp.float32)[None, :])

    # Output dtype: match the module (x.dtype) unless the caller opts into bf16
    # (halves the dominant HBM store term on memory-bound v6e/v7x).
    out_dtype = x.dtype if out_dtype is None else out_dtype
    out_isz = jnp.dtype(out_dtype).itemsize

    tb = _pick_batch_tile(B, n_pad, n_tok, K, E, out_isz)
    need = _vmem_bytes(tb, n_pad, n_tok, K, E, out_isz, resident_buffers=2)
    vmem_limit = int(min(max(need + (4 << 20), 16 << 20), 48 << 20))

    def _run(single_buffer_residents):
        resident_kwargs = (
            dict(pipeline_mode=pl.Buffered(1)) if single_buffer_residents else {})
        grid_spec = pltpu.PrefetchScalarGridSpec(
            num_scalar_prefetch=0,
            grid=(B // tb,),
            in_specs=[
                pl.BlockSpec((tb, n_pad, K), lambda b: (b, 0, 0)),           # patches
                pl.BlockSpec((K, E), lambda b: (0, 0), **resident_kwargs),   # weight
                pl.BlockSpec((n_pad, E), lambda b: (0, 0), **resident_kwargs),  # addend
            ],
            out_specs=pl.BlockSpec((tb, n_tok, E), lambda b: (b, 0, 0)),
        )
        return pl.pallas_call(
            patch_embed_kernel,
            out_shape=jax.ShapeDtypeStruct((B, n_tok, E), out_dtype),
            grid_spec=grid_spec,
            compiler_params=pltpu.CompilerParams(
                dimension_semantics=("parallel",),
                vmem_limit_bytes=vmem_limit),
        )(patches, w_mat, addend)

    try:
        out = _run(True)
    except Exception:
        # pipeline_mode / Buffered(1) unsupported in this Pallas build:
        # fall back to default double-buffered resident operands.
        out = _run(False)

    # TODO(synk): dropout is identity here (inference / p=0.0); training-mode
    # dropout would sample a Bernoulli mask with pltpu.prng_random_bits in-kernel.
    return out


if __name__ == "__main__":
    # Small, module-consistent shapes: in_channels=4, patch_size=4, embed_dim=32,
    # img_size=16, dropout=0.0  ->  N = (16//4)^2 = 16 patches, K = 4*4*4 = 64.
    B, C, H, W = 2, 4, 16, 16
    P, E = 4, 32
    N = (H // P) * (W // P)

    key = jax.random.PRNGKey(0)
    kx, kw, kb, kc, kp = jax.random.split(key, 5)

    x = jax.random.normal(kx, (B, C, H, W), dtype=jnp.float32)
    conv_w = jax.random.normal(kw, (E, C, P, P), dtype=jnp.float32) * 0.02
    conv_b = jax.random.normal(kb, (E,), dtype=jnp.float32) * 0.02
    cls_token = jax.random.normal(kc, (1, 1, E), dtype=jnp.float32)
    positions = jax.random.normal(kp, (N + 1, E), dtype=jnp.float32)

    out = patch_embedding_forward(x, conv_w, conv_b, cls_token, positions,
                                  patch_size=P, dropout_p=0.0)
    out = jax.block_until_ready(out)
    assert out.shape == (B, N + 1, E), out.shape

    # f32 reference (same semantics as the PyTorch module); bf16 matmul operands
    # keep the result within a loose tolerance.
    pat = x.reshape(B, C, H // P, P, W // P, P).transpose(0, 2, 4, 1, 3, 5)
    pat = pat.reshape(B, N, C * P * P)
    ref_tok = pat @ conv_w.reshape(E, -1).T + conv_b + positions[1:]
    ref_cls = jnp.broadcast_to(cls_token.reshape(1, 1, E) + positions[0], (B, 1, E))
    ref = jnp.concatenate([ref_cls, ref_tok], axis=1)
    assert jnp.allclose(out, ref, atol=5e-2, rtol=5e-2), float(
        jnp.max(jnp.abs(out - ref)))

    print("KERNEL_OK")
</pallas_src>

<mosaic_0001>
module attributes {stable_mosaic.version = 11 : i64} {
  func.func @patch_embed_kernel(%arg0: i32, %arg1: memref<1x24x64xbf16, #tpu.memory_space<vmem>>, %arg2: memref<64x32xbf16, #tpu.memory_space<vmem>>, %arg3: memref<24x32xf32, #tpu.memory_space<vmem>>, %arg4: memref<1x17x32xf32, #tpu.memory_space<vmem>>) attributes {dimension_semantics = [#tpu.dimension_semantics<parallel>], iteration_bounds = array<i64: 2>, scalar_prefetch = 0 : i64, scratch_operands = 0 : i64, tpu.core_type = #tpu.core_type<tc>, window_params = [{transform_indices = @transform_0, window_bounds = array<i64: 1, 24, 64>}, {pipeline_mode = #tpu.pipeline_mode<synchronous>, transform_indices = @transform_1, window_bounds = array<i64: 64, 32>}, {pipeline_mode = #tpu.pipeline_mode<synchronous>, transform_indices = @transform_2, window_bounds = array<i64: 24, 32>}, {transform_indices = @transform_3, window_bounds = array<i64: 1, 17, 32>}]} {
    %c0 = arith.constant 0 : index
    %c0_0 = arith.constant 0 : index
    %0 = vector.load %arg2[%c0, %c0_0] : memref<64x32xbf16, #tpu.memory_space<vmem>>, vector<64x32xbf16>
    %c0_1 = arith.constant 0 : index
    %c0_2 = arith.constant 0 : index
    %1 = vector.load %arg3[%c0_1, %c0_2] : memref<24x32xf32, #tpu.memory_space<vmem>>, vector<24x32xf32>
    %c0_3 = arith.constant 0 : index
    %c0_4 = arith.constant 0 : index
    %c0_5 = arith.constant 0 : index
    %2 = vector.load %arg1[%c0_3, %c0_4, %c0_5] : memref<1x24x64xbf16, #tpu.memory_space<vmem>>, vector<1x24x64xbf16>
    %3 = vector.shape_cast %2 : vector<1x24x64xbf16> to vector<24x64xbf16>
    %cst = arith.constant dense<0.000000e+00> : vector<24x32xf32>
    %4 = tpu.matmul %3, %0, %cst {dimension_numbers = #tpu.dot_dimension_numbers<[1], [0], [0], [1], [0, 0, 1, 1], [], []>} : vector<24x64xbf16>, vector<64x32xbf16>, vector<24x32xf32> -> vector<24x32xf32>
    %5 = vector.shape_cast %4 : vector<24x32xf32> to vector<1x24x32xf32>
    %6 = vector.shape_cast %1 : vector<24x32xf32> to vector<1x24x32xf32>
    %7 = arith.addf %5, %6 : vector<1x24x32xf32>
    %8 = vector.extract_strided_slice %7 {offsets = [0, 0, 0], sizes = [1, 17, 32], strides = [1, 1, 1]} : vector<1x24x32xf32> to vector<1x17x32xf32>
    %c0_6 = arith.constant 0 : index
    %c0_7 = arith.constant 0 : index
    %c0_8 = arith.constant 0 : index
    %9 = vector.load %arg4[%c0_6, %c0_7, %c0_8] : memref<1x17x32xf32, #tpu.memory_space<vmem>>, vector<1x17x32xf32>
    tpu.vector_store %arg4[%c0_6, %c0_7, %c0_8], %8 {strides = array<i32>} : memref<1x17x32xf32, #tpu.memory_space<vmem>>, vector<1x17x32xf32>,
    return
  }
  func.func @transform_0(%arg0: i32) -> (i32, i32, i32) {
    %c0_i32 = arith.constant 0 : i32
    %c0_i32_0 = arith.constant 0 : i32
    %c0_i32_1 = arith.constant 0 : i32
    return %arg0, %c0_i32, %c0_i32_0 : i32, i32, i32
  }
  func.func @transform_1(%arg0: i32) -> (i32, i32) {
    %c0_i32 = arith.constant 0 : i32
    %c0_i32_0 = arith.constant 0 : i32
    %c0_i32_1 = arith.constant 0 : i32
    return %c0_i32, %c0_i32_0 : i32, i32
  }
  func.func @transform_2(%arg0: i32) -> (i32, i32) {
    %c0_i32 = arith.constant 0 : i32
    %c0_i32_0 = arith.constant 0 : i32
    %c0_i32_1 = arith.constant 0 : i32
    return %c0_i32, %c0_i32_0 : i32, i32
  }
  func.func @transform_3(%arg0: i32) -> (i32, i32, i32) {
    %c0_i32 = arith.constant 0 : i32
    %c0_i32_0 = arith.constant 0 : i32
    %c0_i32_1 = arith.constant 0 : i32
    return %arg0, %c0_i32, %c0_i32_0 : i32, i32, i32
  }
}

module attributes {stable_mosaic.version = 11 : i64} {
  func.func @patch_embed_kernel(%arg0: i32, %arg1: memref<1x24x64xbf16, #tpu.memory_space<vmem>>, %arg2: memref<64x32xbf16, #tpu.memory_space<vmem>>, %arg3: memref<24x32xf32, #tpu.memory_space<vmem>>, %arg4: memref<1x17x32xf32, #tpu.memory_space<vmem>>) attributes {dimension_semantics = [#tpu.dimension_semantics<parallel>], iteration_bounds = array<i64: 2>, scalar_prefetch = 0 : i64, scratch_operands = 0 : i64, tpu.core_type = #tpu.core_type<tc>, window_params = [{transform_indices = @transform_0, window_bounds = array<i64: 1, 24, 64>}, {pipeline_mode = #tpu.pipeline_mode<synchronous>, transform_indices = @transform_1, window_bounds = array<i64: 64, 32>}, {pipeline_mode = #tpu.pipeline_mode<synchronous>, transform_indices = @transform_2, window_bounds = array<i64: 24, 32>}, {transform_indices = @transform_3, window_bounds = array<i64: 1, 17, 32>}]} {
    %c0 = arith.constant 0 : index
    %c0_0 = arith.constant 0 : index
    %0 = vector.load %arg2[%c0, %c0_0] : memref<64x32xbf16, #tpu.memory_space<vmem>>, vector<64x32xbf16>
    %c0_1 = arith.constant 0 : index
    %c0_2 = arith.constant 0 : index
    %1 = vector.load %arg3[%c0_1, %c0_2] : memref<24x32xf32, #tpu.memory_space<vmem>>, vector<24x32xf32>
    %c0_3 = arith.constant 0 : index
    %c0_4 = arith.constant 0 : index
    %c0_5 = arith.constant 0 : index
    %2 = vector.load %arg1[%c0_3, %c0_4, %c0_5] : memref<1x24x64xbf16, #tpu.memory_space<vmem>>, vector<1x24x64xbf16>
    %3 = vector.shape_cast %2 : vector<1x24x64xbf16> to vector<24x64xbf16>
    %cst = arith.constant dense<0.000000e+00> : vector<24x32xf32>
    %4 = tpu.matmul %3, %0, %cst {dimension_numbers = #tpu.dot_dimension_numbers<[1], [0], [0], [1], [0, 0, 1, 1], [], []>} : vector<24x64xbf16>, vector<64x32xbf16>, vector<24x32xf32> -> vector<24x32xf32>
    %5 = vector.shape_cast %4 : vector<24x32xf32> to vector<1x24x32xf32>
    %6 = vector.shape_cast %1 : vector<24x32xf32> to vector<1x24x32xf32>
    %7 = arith.addf %5, %6 : vector<1x24x32xf32>
    %8 = vector.extract_strided_slice %7 {offsets = [0, 0, 0], sizes = [1, 17, 32], strides = [1, 1, 1]} : vector<1x24x32xf32> to vector<1x17x32xf32>
    %c0_6 = arith.constant 0 : index
    %c0_7 = arith.constant 0 : index
    %c0_8 = arith.constant 0 : index
    %9 = vector.load %arg4[%c0_6, %c0_7, %c0_8] : memref<1x17x32xf32, #tpu.memory_space<vmem>>, vector<1x17x32xf32>
    tpu.vector_store %arg4[%c0_6, %c0_7, %c0_8], %8 {strides = array<i32>} : memref<1x17x32xf32, #tpu.memory_space<vmem>>, vector<1x17x32xf32>,
    return
  }
  func.func @transform_0(%arg0: i32) -> (i32, i32, i32) {
    %c0_i32 = arith.constant 0 : i32
    %c0_i32_0 = arith.constant 0 : i32
    %c0_i32_1 = arith.constant 0 : i32
    return %arg0, %c0_i32, %c0_i32_0 : i32, i32, i32
  }
  func.func @transform_1(%arg0: i32) -> (i32, i32) {
    %c0_i32 = arith.constant 0 : i32
    %c0_i32_0 = arith.constant 0 : i32
    %c0_i32_1 = arith.constant 0 : i32
    return %c0_i32, %c0_i32_0 : i32, i32
  }
  func.func @transform_2(%arg0: i32) -> (i32, i32) {
    %c0_i32 = arith.constant 0 : i32
    %c0_i32_0 = arith.constant 0 : i32
    %c0_i32_1 = arith.constant 0 : i32
    return %c0_i32, %c0_i32_0 : i32, i32
  }
  func.func @transform_3(%arg0: i32) -> (i32, i32, i32) {
    %c0_i32 = arith.constant 0 : i32
    %c0_i32_0 = arith.constant 0 : i32
    %c0_i32_1 = arith.constant 0 : i32
    return %arg0, %c0_i32, %c0_i32_0 : i32, i32, i32
  }
}

</mosaic_0001>

<llo_original>
// kernel: tpu_custom_call.1
$region0: #{tpu_custom_call.1}
  #allocation0 [shape = 'u32[]', space=smem, size = 0x4, offset = 0x4, fixed_abs, tag = 'smem constant byte address 0x4 - core index']
  #allocation1 [shape = 'u32[144,128]{1,0:T(1,128)}', space=vmem, size = 0x12000, scoped, tag = 'internal scratch']
  %s0 = inlined_call_operand.vmem [shape: bf16[2,24,64], index: 0, kind: input, shape index: {}]
  %s1 = inlined_call_operand.vmem [shape: bf16[64,32], index: 1, kind: input, shape index: {}]
  %s2 = inlined_call_operand.vmem [shape: f32[24,32], index: 2, kind: input, shape index: {}]
  %s3 = inlined_call_operand.vmem [shape: f32[2,17,32], index: 3, kind: output, shape index: {}]
  %s4 = sld [smem:[#allocation0]]
  $region45: #{tpu_custom_call.1} parent=0
    _
  %s6 = ssub.s32 1, %s4
  %s7 = scalar_select 0, %s6, %s4
  loop: start=0, step=1, limit=4
  $region2: #{tpu_custom_call.1} parent=0 // loop_pre_header
    _
  $region3: #{tpu_custom_call.1} parent=0 // loop_header
    %s9 = sphi 0, %s13
    %p10 = scmp.ge.s32.totalorder %s9, 4
    %s19 = sphi 0, %s21
    %s22 = sphi 0, %s19
    %s23 = sphi 0, %s22
    %s39 = sphi 0, %s23
    %s43 = sphi 0, %s43
    %s45 = sphi 0, %s43
    %s46 = sphi 0, %s45
    %s60 = sphi 0, %s46
    %s64 = sphi 0, %s64
    %s66 = sphi 0, %s64
    %s67 = sphi 0, %s66
    %s81 = sphi 0, %s67
    %s87 = sphi 0, %s89
    %s90 = sphi 0, %s87
    %s91 = sphi 0, %s90
    %s107 = sphi 0, %s91
  $region4: #{tpu_custom_call.1} parent=0 // loop_header_branch
    %12 = sbr.rel (%p10) target = $region8
  $region5: #{tpu_custom_call.1} parent=0 // loop_body
    %s14 = ssub.s32 %s9, 1
    %s15 = ssub.s32 %s9, 2
    %s16 = sadd.s32 %s9, 1
    %s17 = ssub.s32 %s9, %s16
    %p18 = scmp.eq.s32.totalorder %s17, 0
    %s20 = sadd.s32 %s19, 1
    %s21 = scalar_select %p18, %s19, %s20
    %p24 = pneg %p18
    %p25 = scmp.eq.s32.totalorder %s9, 1
    %p26 = por %p24, %p25
    %p27 = scmp.ne.s32.totalorder %s19, %s22
    %p28 = scmp.eq.s32.totalorder %s9, 0
    %p29 = por %p27, %p28
    %p30 = scmp.ne.s32.totalorder %s19, %s22
    %p31 = scmp.eq.s32.totalorder %s14, 1
    %p32 = por %p30, %p31
    %p33 = scmp.ne.s32.totalorder %s22, %s23
    %p34 = scmp.eq.s32.totalorder %s14, 0
    %p35 = por %p33, %p34
    %p36 = scmp.ne.s32.totalorder %s22, %s23
    %p37 = scmp.eq.s32.totalorder %s15, 1
    %p38 = por %p36, %p37
    %p40 = scmp.ne.s32.totalorder %s23, %s39
    %p41 = scmp.eq.s32.totalorder %s15, 0
    %p42 = por %p40, %p41
    %s44 = sadd.s32 %s43, 1
    %p47 = scmp.eq.s32.totalorder %s9, 1
    %p48 = scmp.ne.s32.totalorder %s43, %s45
    %p49 = scmp.eq.s32.totalorder %s9, 0
    %p50 = por %p48, %p49
    %p51 = scmp.ne.s32.totalorder %s43, %s45
    %p52 = scmp.eq.s32.totalorder %s14, 1
    %p53 = por %p51, %p52
    %p54 = scmp.ne.s32.totalorder %s45, %s46
    %p55 = scmp.eq.s32.totalorder %s14, 0
    %p56 = por %p54, %p55
    %p57 = scmp.ne.s32.totalorder %s45, %s46
    %p58 = scmp.eq.s32.totalorder %s15, 1
    %p59 = por %p57, %p58
    %p61 = scmp.ne.s32.totalorder %s46, %s60
    %p62 = scmp.eq.s32.totalorder %s15, 0
    %p63 = por %p61, %p62
    %s65 = sadd.s32 %s64, 1
    %p68 = scmp.eq.s32.totalorder %s9, 1
    %p69 = scmp.ne.s32.totalorder %s64, %s66
    %p70 = scmp.eq.s32.totalorder %s9, 0
    %p71 = por %p69, %p70
    %p72 = scmp.ne.s32.totalorder %s64, %s66
    %p73 = scmp.eq.s32.totalorder %s14, 1
    %p74 = por %p72, %p73
    %p75 = scmp.ne.s32.totalorder %s66, %s67
    %p76 = scmp.eq.s32.totalorder %s14, 0
    %p77 = por %p75, %p76
    %p78 = scmp.ne.s32.totalorder %s66, %s67
    %p79 = scmp.eq.s32.totalorder %s15, 1
    %p80 = por %p78, %p79
    %p82 = scmp.ne.s32.totalorder %s67, %s81
    %p83 = scmp.eq.s32.totalorder %s15, 0
    %p84 = por %p82, %p83
    %s85 = ssub.s32 %s9, %s16
    %p86 = scmp.eq.s32.totalorder %s85, 0
    %s88 = sadd.s32 %s87, 1
    %s89 = scalar_select %p86, %s87, %s88
    %p92 = pneg %p86
    %p93 = scmp.eq.s32.totalorder %s9, 1
    %p94 = por %p92, %p93
    %p95 = scmp.ne.s32.totalorder %s87, %s90
    %p96 = scmp.eq.s32.totalorder %s9, 0
    %p97 = por %p95, %p96
    %p98 = scmp.ne.s32.totalorder %s87, %s90
    %p99 = scmp.eq.s32.totalorder %s14, 1
    %p100 = por %p98, %p99
    %p101 = scmp.ne.s32.totalorder %s90, %s91
    %p102 = scmp.eq.s32.totalorder %s14, 0
    %p103 = por %p101, %p102
    %p104 = scmp.ne.s32.totalorder %s90, %s91
    %p105 = scmp.eq.s32.totalorder %s15, 1
    %p106 = por %p104, %p105
    %p108 = scmp.ne.s32.totalorder %s91, %s107
    %p109 = scmp.eq.s32.totalorder %s15, 0
    %p110 = por %p108, %p109
    %p111 = scmp.le.s32.totalorder 1, %s9
    %p112 = scmp.lt.s32.totalorder %s9, 3
    %p113 = pnand %p111, %p112
    %p114 = pneg %p113
    // Predicated region
    $region9: #{tpu_custom_call.1} parent=5 // pred_check
      _
    $region10: #{tpu_custom_call.1} parent=5 // pred_check_branch
      %116 = sbr.rel (%p113) target = $region12
    $region11: #{tpu_custom_call.1} parent=5 // pred_region
      %s117 = ssub.s32 %s9, 1
      // Predicated region
      $region13: #{tpu_custom_call.1} parent=11 // pred_check
        %p118 = pneg %p56
      $region14: #{tpu_custom_call.1} parent=11 // pred_check_branch
        %120 = sbr.rel (%p118) target = $region16
      $region15: #{tpu_custom_call.1} parent=11 // pred_region
        _
      $region16: #{tpu_custom_call.1} parent=11 // pred_fallthru
        _
      // Predicated region
      $region17: #{tpu_custom_call.1} parent=11 // pred_check
        %p121 = pneg %p77
      $region18: #{tpu_custom_call.1} parent=11 // pred_check_branch
        %123 = sbr.rel (%p121) target = $region20
      $region19: #{tpu_custom_call.1} parent=11 // pred_region
        _
      $region20: #{tpu_custom_call.1} parent=11 // pred_fallthru
        _
    $region12: #{tpu_custom_call.1} parent=5 // pred_fallthru
      _
    %p124 = scmp.lt.s32.totalorder %s9, 2
    // Predicated region
    $region21: #{tpu_custom_call.1} parent=5 // pred_check
      %p125 = pneg %p124
    $region22: #{tpu_custom_call.1} parent=5 // pred_check_branch
      %127 = sbr.rel (%p125) target = $region24
    $region23: #{tpu_custom_call.1} parent=5 // pred_region
      // Predicated region
      $region25: #{tpu_custom_call.1} parent=23 // pred_check
        %p128 = pneg %p29
      $region26: #{tpu_custom_call.1} parent=23 // pred_check_branch
        %130 = sbr.rel (%p128) target = $region28
      $region27: #{tpu_custom_call.1} parent=23 // pred_region
        %p131 = scmp.lt.s32.totalorder %s9, 1
        %s132 = scalar_select %p131, %s9, 1
        %s133 = smul.addr %s132, 3
        %s134 = smul.addr %s133, 4
        %s135 = scalar_lea.vmem %s0, %s134
      $region28: #{tpu_custom_call.1} parent=23 // pred_fallthru
        _
    $region24: #{tpu_custom_call.1} parent=5 // pred_fallthru
      _
    %p136 = scmp.le.s32.totalorder 1, %s9
    %p137 = scmp.lt.s32.totalorder %s9, 3
    %p138 = pnand %p136, %p137
    %p139 = pneg %p138
    // Predicated region
    $region29: #{tpu_custom_call.1} parent=5 // pred_check
      _
    $region30: #{tpu_custom_call.1} parent=5 // pred_check_branch
      %141 = sbr.rel (%p138) target = $region32
    $region31: #{tpu_custom_call.1} parent=5 // pred_region
      %s142 = ssub.s32 %s9, 1
      %p143 = scmp.lt.s32.totalorder %s14, 1
      %s144 = scalar_select %p143, %s14, 1
      %s145 = smul.addr %s144, 3
      %s146 = smul.addr %s145, 4
      %s147 = scalar_lea.vmem %s0, %s146
      %p148 = pneg %p35
      %p149 = pneg %p32
      %p150 = pneg %p56
      %p151 = pneg %p53
      %p152 = pneg %p77
      %p153 = pneg %p74
      %p154 = pneg %p103
      %p155 = pneg %p100
      %p156 = scmp.lt.s32.totalorder %s14, 1
      %s157 = scalar_select %p156, %s14, 1
      %s158 = smul.addr %s157, 3
      %s159 = smul.addr %s158, 8
      %s160 = scalar_lea.vmem %s3, %s159
      %p161 = scmp.lt.s32.totalorder %s14, 1
      %s162 = scalar_select %p161, %s14, 1
      %s163 = smul.addr %s162, 3
      %s164 = smul.addr %s163, 4
      %s165 = scalar_lea.vmem %s0, %s164
      %p166 = scmp.lt.s32.totalorder %s14, 1
      %s167 = scalar_select %p166, %s14, 1
      %s168 = smul.addr %s167, 3
      %s169 = smul.addr %s168, 8
      %s170 = scalar_lea.vmem %s3, %s169
      %v172 = vld [vmem:[%s1] sm:$0xf]
      %v173 = vld [vmem:[%s1 + $0x4] sm:$0xf]
      %v174 = vld [vmem:[%s1 + $0x8] sm:$0xf]
      %v175 = vld [vmem:[%s1 + $0xc] sm:$0xf]
      %v176 = vld [vmem:[%s1 + $0x10] sm:$0xf]
      %v177 = vld [vmem:[%s1 + $0x14] sm:$0xf]
      %v178 = vld [vmem:[%s1 + $0x18] sm:$0xf]
      %v179 = vld [vmem:[%s1 + $0x1c] sm:$0xf]
      %v180 = vld [vmem:[%s2] sm:$0xff]
      %v181 = vld [vmem:[%s2 + $0x8] sm:$0xff]
      %v182 = vld [vmem:[%s2 + $0x10] sm:$0xff]
      %v183 = vld [vmem:[%s165] sm:$0xf]
      %v184 = vld [vmem:[%s165 + $0x4] sm:$0xf]
      %v185 = vld [vmem:[%s165 + $0x8] sm:$0xf]
      %v189 = vunpack.c.l.b16 %v183
      %v190 = vunpack.c.l.b16 %v184
      %v191 = vunpack.c.l.b16 %v185
      %v192 = vpack.c.b16 %v190, %v189
      %v193 = vpack.c.b16 %v191, %v191
      %v202 = vunpack.c.l.b16 %v172
      %v203 = vunpack.c.l.b16 %v173
      %v204 = vunpack.c.l.b16 %v174
      %v205 = vunpack.c.l.b16 %v175
      %v206 = vunpack.c.l.b16 %v176
      %v207 = vunpack.c.l.b16 %v177
      %v208 = vunpack.c.l.b16 %v178
      %v209 = vunpack.c.l.b16 %v179
      %v210 = vpack.c.b16 %v203, %v202
      %v211 = vpack.c.b16 %v205, %v204
      %v212 = vpack.c.b16 %v207, %v206
      %v213 = vpack.c.b16 %v209, %v208
      %vm218 = vcmask 523264
      %v220 = vsel %vm218, %v192, 0
      %v223 = vsel %vm218, %v193, 0
      %225 = vmatprep.subr.bf16.mxu0 0
      %226 = vmatpush1.bf16.msra.mxu0 %v210
      %227 = vmatprep.subr.bf16.mxu0 0
      %228 = vmatpush1.bf16.msra.mxu0 %v211
      %229 = vmatprep.subr.bf16.mxu0 0
      %230 = vmatpush1.bf16.msra.mxu0 %v212
      %231 = vmatprep.subr.bf16.mxu0 0
      %232 = vmatpush1.bf16.msra.mxu0 %v213
      %233 = vmatprep.subr.bf16.mxu0 0
      %234 = vmatpush1.bf16.msra.mxu0 0
      %235 = vmatprep.subr.bf16.mxu0 0
      %236 = vmatpush1.bf16.msra.mxu0 0
      %237 = vmatprep.subr.bf16.mxu0 0
      %238 = vmatpush1.bf16.msra.mxu0 0
      %239 = vmatprep.subr.bf16.mxu0 0
      %240 = vmatpush1.bf16.msra.mxu0 0
      %241 = vmatprep.subr.bf16.mxu0 0
      %242 = vmatpush1.bf16.msra.mxu0 0
      %243 = vmatprep.subr.bf16.mxu0 0
      %244 = vmatpush1.bf16.msra.mxu0 0
      %245 = vmatprep.subr.bf16.mxu0 0
      %246 = vmatpush1.bf16.msra.mxu0 0
      %247 = vmatprep.subr.bf16.mxu0 0
      %248 = vmatpush1.bf16.msra.mxu0 0
      %249 = vmatprep.subr.bf16.mxu0 0
      %250 = vmatpush1.bf16.msra.mxu0 0
      %251 = vmatprep.subr.bf16.mxu0 0
      %252 = vmatpush1.bf16.msra.mxu0 0
      %253 = vmatprep.subr.bf16.mxu0 0
      %254 = vmatpush1.bf16.msra.mxu0 0
      %255 = vmatprep.subr.bf16.mxu0 0
      %256 = vmatpush1.bf16.msra.mxu0 0
      %257 = vmatprep.mubr.bf16.mxu0 0
      %258 = vmatmul.mubr.bf16.gmra.mrb[0].mxu0 %v220
      %v259 = vpop.f32.mrb[0].mxu0
      %v260 = vadd.f32 0.0, %v259
      %v261 = vpop.f32.mrb[0].mxu0
      %v262 = vpop.f32.mrb[0].mxu0
      %v263 = vadd.f32 0.0, %v262
      %v264 = vpop.f32.mrb[0].mxu0
      %265 = vmatprep.mubr.bf16.mxu0 0
      %266 = vmatmul.mubr.bf16.gmra.mrb[0].mxu0 %v223
      %v267 = vpop.f32.mrb[0].mxu0
      %v268 = vadd.f32 0.0, %v267
      %v269 = vpop.f32.mrb[0].mxu0
      %v270 = vpop.f32.mrb[0].mxu0
      %v271 = vpop.f32.mrb[0].mxu0
      %272 = vdwg.mxu0
      %v273 = vadd.f32 %v260, %v180
      %v274 = vadd.f32 %v263, %v181
      %v275 = vadd.f32 %v268, %v182
      %vm276 = vcmask 261120
      %277 = vst.msk [vmem:[%s170] sm:$0xff] %vm276, %v273
      %278 = vst.msk [vmem:[%s170 + $0x8] sm:$0xff] %vm276, %v274
      %vm279 = vcmask 253952
      %280 = vst.msk [vmem:[%s170 + $0x10] sm:$0x1] %vm279, %v275
      %p281 = scmp.lt.s32.totalorder %s14, 1
      %s282 = scalar_select %p281, %s14, 1
      %s283 = smul.addr %s282, 3
      %s284 = smul.addr %s283, 8
      %s285 = scalar_lea.vmem %s3, %s284
      // Predicated region
      $region33: #{tpu_custom_call.1} parent=31 // pred_check
        %p286 = pneg %p100
      $region34: #{tpu_custom_call.1} parent=31 // pred_check_branch
        %288 = sbr.rel (%p286) target = $region36
      $region35: #{tpu_custom_call.1} parent=31 // pred_region
        _
      $region36: #{tpu_custom_call.1} parent=31 // pred_fallthru
        _
    $region32: #{tpu_custom_call.1} parent=5 // pred_fallthru
      _
    %p289 = scmp.le.s32.totalorder 2, %s9
    // Predicated region
    $region37: #{tpu_custom_call.1} parent=5 // pred_check
      %p290 = pneg %p289
    $region38: #{tpu_custom_call.1} parent=5 // pred_check_branch
      %292 = sbr.rel (%p290) target = $region40
    $region39: #{tpu_custom_call.1} parent=5 // pred_region
      %s293 = ssub.s32 %s9, 2
      // Predicated region
      $region41: #{tpu_custom_call.1} parent=39 // pred_check
        %p294 = pneg %p106
      $region42: #{tpu_custom_call.1} parent=39 // pred_check_branch
        %296 = sbr.rel (%p294) target = $region44
      $region43: #{tpu_custom_call.1} parent=39 // pred_region
        %p297 = scmp.lt.s32.totalorder %s15, 1
        %s298 = scalar_select %p297, %s15, 1
        %s299 = smul.addr %s298, 3
        %s300 = smul.addr %s299, 8
        %s301 = scalar_lea.vmem %s3, %s300
      $region44: #{tpu_custom_call.1} parent=39 // pred_fallthru
        _
    $region40: #{tpu_custom_call.1} parent=5 // pred_fallthru
      _
  $region6: #{tpu_custom_call.1} parent=0 // loop_footer
    %s13 = sadd.s32 1, %s9
  $region7: #{tpu_custom_call.1} parent=0 // loop_footer_branch
    %8 = sbr.rel target = $region3
  $region8: #{tpu_custom_call.1} parent=0 // loop_exit
    _

// kernel: tpu_custom_call.1
$region0: #{tpu_custom_call.1}
  #allocation0 [shape = 'u32[]', space=smem, size = 0x4, offset = 0x4, fixed_abs, tag = 'smem constant byte address 0x4 - core index']
  #allocation1 [shape = 'u32[144,128]{1,0:T(1,128)}', space=vmem, size = 0x12000, scoped, tag = 'internal scratch']
  %s0 = inlined_call_operand.vmem [shape: bf16[2,24,64], index: 0, kind: input, shape index: {}]
  %s1 = inlined_call_operand.vmem [shape: bf16[64,32], index: 1, kind: input, shape index: {}]
  %s2 = inlined_call_operand.vmem [shape: f32[24,32], index: 2, kind: input, shape index: {}]
  %s3 = inlined_call_operand.vmem [shape: f32[2,17,32], index: 3, kind: output, shape index: {}]
  %s4 = sld [smem:[#allocation0]]
  $region45: #{tpu_custom_call.1} parent=0
    _
  %s6 = ssub.s32 1, %s4
  %s7 = scalar_select 0, %s6, %s4
  loop: start=0, step=1, limit=4
  $region2: #{tpu_custom_call.1} parent=0 // loop_pre_header
    _
  $region3: #{tpu_custom_call.1} parent=0 // loop_header
    %s9 = sphi 0, %s13
    %p10 = scmp.ge.s32.totalorder %s9, 4
    %s19 = sphi 0, %s21
    %s22 = sphi 0, %s19
    %s23 = sphi 0, %s22
    %s39 = sphi 0, %s23
    %s43 = sphi 0, %s43
    %s45 = sphi 0, %s43
    %s46 = sphi 0, %s45
    %s60 = sphi 0, %s46
    %s64 = sphi 0, %s64
    %s66 = sphi 0, %s64
    %s67 = sphi 0, %s66
    %s81 = sphi 0, %s67
    %s87 = sphi 0, %s89
    %s90 = sphi 0, %s87
    %s91 = sphi 0, %s90
    %s107 = sphi 0, %s91
  $region4: #{tpu_custom_call.1} parent=0 // loop_header_branch
    %12 = sbr.rel (%p10) target = $region8
  $region5: #{tpu_custom_call.1} parent=0 // loop_body
    %s14 = ssub.s32 %s9, 1
    %s15 = ssub.s32 %s9, 2
    %s16 = sadd.s32 %s9, 1
    %s17 = ssub.s32 %s9, %s16
    %p18 = scmp.eq.s32.totalorder %s17, 0
    %s20 = sadd.s32 %s19, 1
    %s21 = scalar_select %p18, %s19, %s20
    %p24 = pneg %p18
    %p25 = scmp.eq.s32.totalorder %s9, 1
    %p26 = por %p24, %p25
    %p27 = scmp.ne.s32.totalorder %s19, %s22
    %p28 = scmp.eq.s32.totalorder %s9, 0
    %p29 = por %p27, %p28
    %p30 = scmp.ne.s32.totalorder %s19, %s22
    %p31 = scmp.eq.s32.totalorder %s14, 1
    %p32 = por %p30, %p31
    %p33 = scmp.ne.s32.totalorder %s22, %s23
    %p34 = scmp.eq.s32.totalorder %s14, 0
    %p35 = por %p33, %p34
    %p36 = scmp.ne.s32.totalorder %s22, %s23
    %p37 = scmp.eq.s32.totalorder %s15, 1
    %p38 = por %p36, %p37
    %p40 = scmp.ne.s32.totalorder %s23, %s39
    %p41 = scmp.eq.s32.totalorder %s15, 0
    %p42 = por %p40, %p41
    %s44 = sadd.s32 %s43, 1
    %p47 = scmp.eq.s32.totalorder %s9, 1
    %p48 = scmp.ne.s32.totalorder %s43, %s45
    %p49 = scmp.eq.s32.totalorder %s9, 0
    %p50 = por %p48, %p49
    %p51 = scmp.ne.s32.totalorder %s43, %s45
    %p52 = scmp.eq.s32.totalorder %s14, 1
    %p53 = por %p51, %p52
    %p54 = scmp.ne.s32.totalorder %s45, %s46
    %p55 = scmp.eq.s32.totalorder %s14, 0
    %p56 = por %p54, %p55
    %p57 = scmp.ne.s32.totalorder %s45, %s46
    %p58 = scmp.eq.s32.totalorder %s15, 1
    %p59 = por %p57, %p58
    %p61 = scmp.ne.s32.totalorder %s46, %s60
    %p62 = scmp.eq.s32.totalorder %s15, 0
    %p63 = por %p61, %p62
    %s65 = sadd.s32 %s64, 1
    %p68 = scmp.eq.s32.totalorder %s9, 1
    %p69 = scmp.ne.s32.totalorder %s64, %s66
    %p70 = scmp.eq.s32.totalorder %s9, 0
    %p71 = por %p69, %p70
    %p72 = scmp.ne.s32.totalorder %s64, %s66
    %p73 = scmp.eq.s32.totalorder %s14, 1
    %p74 = por %p72, %p73
    %p75 = scmp.ne.s32.totalorder %s66, %s67
    %p76 = scmp.eq.s32.totalorder %s14, 0
    %p77 = por %p75, %p76
    %p78 = scmp.ne.s32.totalorder %s66, %s67
    %p79 = scmp.eq.s32.totalorder %s15, 1
    %p80 = por %p78, %p79
    %p82 = scmp.ne.s32.totalorder %s67, %s81
    %p83 = scmp.eq.s32.totalorder %s15, 0
    %p84 = por %p82, %p83
    %s85 = ssub.s32 %s9, %s16
    %p86 = scmp.eq.s32.totalorder %s85, 0
    %s88 = sadd.s32 %s87, 1
    %s89 = scalar_select %p86, %s87, %s88
    %p92 = pneg %p86
    %p93 = scmp.eq.s32.totalorder %s9, 1
    %p94 = por %p92, %p93
    %p95 = scmp.ne.s32.totalorder %s87, %s90
    %p96 = scmp.eq.s32.totalorder %s9, 0
    %p97 = por %p95, %p96
    %p98 = scmp.ne.s32.totalorder %s87, %s90
    %p99 = scmp.eq.s32.totalorder %s14, 1
    %p100 = por %p98, %p99
    %p101 = scmp.ne.s32.totalorder %s90, %s91
    %p102 = scmp.eq.s32.totalorder %s14, 0
    %p103 = por %p101, %p102
    %p104 = scmp.ne.s32.totalorder %s90, %s91
    %p105 = scmp.eq.s32.totalorder %s15, 1
    %p106 = por %p104, %p105
    %p108 = scmp.ne.s32.totalorder %s91, %s107
    %p109 = scmp.eq.s32.totalorder %s15, 0
    %p110 = por %p108, %p109
    %p111 = scmp.le.s32.totalorder 1, %s9
    %p112 = scmp.lt.s32.totalorder %s9, 3
    %p113 = pnand %p111, %p112
    %p114 = pneg %p113
    // Predicated region
    $region9: #{tpu_custom_call.1} parent=5 // pred_check
      _
    $region10: #{tpu_custom_call.1} parent=5 // pred_check_branch
      %116 = sbr.rel (%p113) target = $region12
    $region11: #{tpu_custom_call.1} parent=5 // pred_region
      %s117 = ssub.s32 %s9, 1
      // Predicated region
      $region13: #{tpu_custom_call.1} parent=11 // pred_check
        %p118 = pneg %p56
      $region14: #{tpu_custom_call.1} parent=11 // pred_check_branch
        %120 = sbr.rel (%p118) target = $region16
      $region15: #{tpu_custom_call.1} parent=11 // pred_region
        _
      $region16: #{tpu_custom_call.1} parent=11 // pred_fallthru
        _
      // Predicated region
      $region17: #{tpu_custom_call.1} parent=11 // pred_check
        %p121 = pneg %p77
      $region18: #{tpu_custom_call.1} parent=11 // pred_check_branch
        %123 = sbr.rel (%p121) target = $region20
      $region19: #{tpu_custom_call.1} parent=11 // pred_region
        _
      $region20: #{tpu_custom_call.1} parent=11 // pred_fallthru
        _
    $region12: #{tpu_custom_call.1} parent=5 // pred_fallthru
      _
    %p124 = scmp.lt.s32.totalorder %s9, 2
    // Predicated region
    $region21: #{tpu_custom_call.1} parent=5 // pred_check
      %p125 = pneg %p124
    $region22: #{tpu_custom_call.1} parent=5 // pred_check_branch
      %127 = sbr.rel (%p125) target = $region24
    $region23: #{tpu_custom_call.1} parent=5 // pred_region
      // Predicated region
      $region25: #{tpu_custom_call.1} parent=23 // pred_check
        %p128 = pneg %p29
      $region26: #{tpu_custom_call.1} parent=23 // pred_check_branch
        %130 = sbr.rel (%p128) target = $region28
      $region27: #{tpu_custom_call.1} parent=23 // pred_region
        %p131 = scmp.lt.s32.totalorder %s9, 1
        %s132 = scalar_select %p131, %s9, 1
        %s133 = smul.addr %s132, 3
        %s134 = smul.addr %s133, 4
        %s135 = scalar_lea.vmem %s0, %s134
      $region28: #{tpu_custom_call.1} parent=23 // pred_fallthru
        _
    $region24: #{tpu_custom_call.1} parent=5 // pred_fallthru
      _
    %p136 = scmp.le.s32.totalorder 1, %s9
    %p137 = scmp.lt.s32.totalorder %s9, 3
    %p138 = pnand %p136, %p137
    %p139 = pneg %p138
    // Predicated region
    $region29: #{tpu_custom_call.1} parent=5 // pred_check
      _
    $region30: #{tpu_custom_call.1} parent=5 // pred_check_branch
      %141 = sbr.rel (%p138) target = $region32
    $region31: #{tpu_custom_call.1} parent=5 // pred_region
      %s142 = ssub.s32 %s9, 1
      %p143 = scmp.lt.s32.totalorder %s14, 1
      %s144 = scalar_select %p143, %s14, 1
      %s145 = smul.addr %s144, 3
      %s146 = smul.addr %s145, 4
      %s147 = scalar_lea.vmem %s0, %s146
      %p148 = pneg %p35
      %p149 = pneg %p32
      %p150 = pneg %p56
      %p151 = pneg %p53
      %p152 = pneg %p77
      %p153 = pneg %p74
      %p154 = pneg %p103
      %p155 = pneg %p100
      %p156 = scmp.lt.s32.totalorder %s14, 1
      %s157 = scalar_select %p156, %s14, 1
      %s158 = smul.addr %s157, 3
      %s159 = smul.addr %s158, 8
      %s160 = scalar_lea.vmem %s3, %s159
      %p161 = scmp.lt.s32.totalorder %s14, 1
      %s162 = scalar_select %p161, %s14, 1
      %s163 = smul.addr %s162, 3
      %s164 = smul.addr %s163, 4
      %s165 = scalar_lea.vmem %s0, %s164
      %p166 = scmp.lt.s32.totalorder %s14, 1
      %s167 = scalar_select %p166, %s14, 1
      %s168 = smul.addr %s167, 3
      %s169 = smul.addr %s168, 8
      %s170 = scalar_lea.vmem %s3, %s169
      %v172 = vld [vmem:[%s1] sm:$0xf]
      %v173 = vld [vmem:[%s1 + $0x4] sm:$0xf]
      %v174 = vld [vmem:[%s1 + $0x8] sm:$0xf]
      %v175 = vld [vmem:[%s1 + $0xc] sm:$0xf]
      %v176 = vld [vmem:[%s1 + $0x10] sm:$0xf]
      %v177 = vld [vmem:[%s1 + $0x14] sm:$0xf]
      %v178 = vld [vmem:[%s1 + $0x18] sm:$0xf]
      %v179 = vld [vmem:[%s1 + $0x1c] sm:$0xf]
      %v180 = vld [vmem:[%s2] sm:$0xff]
      %v181 = vld [vmem:[%s2 + $0x8] sm:$0xff]
      %v182 = vld [vmem:[%s2 + $0x10] sm:$0xff]
      %v183 = vld [vmem:[%s165] sm:$0xf]
      %v184 = vld [vmem:[%s165 + $0x4] sm:$0xf]
      %v185 = vld [vmem:[%s165 + $0x8] sm:$0xf]
      %v189 = vunpack.c.l.b16 %v183
      %v190 = vunpack.c.l.b16 %v184
      %v191 = vunpack.c.l.b16 %v185
      %v192 = vpack.c.b16 %v190, %v189
      %v193 = vpack.c.b16 %v191, %v191
      %v202 = vunpack.c.l.b16 %v172
      %v203 = vunpack.c.l.b16 %v173
      %v204 = vunpack.c.l.b16 %v174
      %v205 = vunpack.c.l.b16 %v175
      %v206 = vunpack.c.l.b16 %v176
      %v207 = vunpack.c.l.b16 %v177
      %v208 = vunpack.c.l.b16 %v178
      %v209 = vunpack.c.l.b16 %v179
      %v210 = vpack.c.b16 %v203, %v202
      %v211 = vpack.c.b16 %v205, %v204
      %v212 = vpack.c.b16 %v207, %v206
      %v213 = vpack.c.b16 %v209, %v208
      %vm218 = vcmask 523264
      %v220 = vsel %vm218, %v192, 0
      %v223 = vsel %vm218, %v193, 0
      %225 = vmatprep.subr.bf16.mxu0 0
      %226 = vmatpush1.bf16.msra.mxu0 %v210
      %227 = vmatprep.subr.bf16.mxu0 0
      %228 = vmatpush1.bf16.msra.mxu0 %v211
      %229 = vmatprep.subr.bf16.mxu0 0
      %230 = vmatpush1.bf16.msra.mxu0 %v212
      %231 = vmatprep.subr.bf16.mxu0 0
      %232 = vmatpush1.bf16.msra.mxu0 %v213
      %233 = vmatprep.subr.bf16.mxu0 0
      %234 = vmatpush1.bf16.msra.mxu0 0
      %235 = vmatprep.subr.bf16.mxu0 0
      %236 = vmatpush1.bf16.msra.mxu0 0
      %237 = vmatprep.subr.bf16.mxu0 0
      %238 = vmatpush1.bf16.msra.mxu0 0
      %239 = vmatprep.subr.bf16.mxu0 0
      %240 = vmatpush1.bf16.msra.mxu0 0
      %241 = vmatprep.subr.bf16.mxu0 0
      %242 = vmatpush1.bf16.msra.mxu0 0
      %243 = vmatprep.subr.bf16.mxu0 0
      %244 = vmatpush1.bf16.msra.mxu0 0
      %245 = vmatprep.subr.bf16.mxu0 0
      %246 = vmatpush1.bf16.msra.mxu0 0
      %247 = vmatprep.subr.bf16.mxu0 0
      %248 = vmatpush1.bf16.msra.mxu0 0
      %249 = vmatprep.subr.bf16.mxu0 0
      %250 = vmatpush1.bf16.msra.mxu0 0
      %251 = vmatprep.subr.bf16.mxu0 0
      %252 = vmatpush1.bf16.msra.mxu0 0
      %253 = vmatprep.subr.bf16.mxu0 0
      %254 = vmatpush1.bf16.msra.mxu0 0
      %255 = vmatprep.subr.bf16.mxu0 0
      %256 = vmatpush1.bf16.msra.mxu0 0
      %257 = vmatprep.mubr.bf16.mxu0 0
      %258 = vmatmul.mubr.bf16.gmra.mrb[0].mxu0 %v220
      %v259 = vpop.f32.mrb[0].mxu0
      %v260 = vadd.f32 0.0, %v259
      %v261 = vpop.f32.mrb[0].mxu0
      %v262 = vpop.f32.mrb[0].mxu0
      %v263 = vadd.f32 0.0, %v262
      %v264 = vpop.f32.mrb[0].mxu0
      %265 = vmatprep.mubr.bf16.mxu0 0
      %266 = vmatmul.mubr.bf16.gmra.mrb[0].mxu0 %v223
      %v267 = vpop.f32.mrb[0].mxu0
      %v268 = vadd.f32 0.0, %v267
      %v269 = vpop.f32.mrb[0].mxu0
      %v270 = vpop.f32.mrb[0].mxu0
      %v271 = vpop.f32.mrb[0].mxu0
      %272 = vdwg.mxu0
      %v273 = vadd.f32 %v260, %v180
      %v274 = vadd.f32 %v263, %v181
      %v275 = vadd.f32 %v268, %v182
      %vm276 = vcmask 261120
      %277 = vst.msk [vmem:[%s170] sm:$0xff] %vm276, %v273
      %278 = vst.msk [vmem:[%s170 + $0x8] sm:$0xff] %vm276, %v274
      %vm279 = vcmask 253952
      %280 = vst.msk [vmem:[%s170 + $0x10] sm:$0x1] %vm279, %v275
      %p281 = scmp.lt.s32.totalorder %s14, 1
      %s282 = scalar_select %p281, %s14, 1
      %s283 = smul.addr %s282, 3
      %s284 = smul.addr %s283, 8
      %s285 = scalar_lea.vmem %s3, %s284
      // Predicated region
      $region33: #{tpu_custom_call.1} parent=31 // pred_check
        %p286 = pneg %p100
      $region34: #{tpu_custom_call.1} parent=31 // pred_check_branch
        %288 = sbr.rel (%p286) target = $region36
      $region35: #{tpu_custom_call.1} parent=31 // pred_region
        _
      $region36: #{tpu_custom_call.1} parent=31 // pred_fallthru
        _
    $region32: #{tpu_custom_call.1} parent=5 // pred_fallthru
      _
    %p289 = scmp.le.s32.totalorder 2, %s9
    // Predicated region
    $region37: #{tpu_custom_call.1} parent=5 // pred_check
      %p290 = pneg %p289
    $region38: #{tpu_custom_call.1} parent=5 // pred_check_branch
      %292 = sbr.rel (%p290) target = $region40
    $region39: #{tpu_custom_call.1} parent=5 // pred_region
      %s293 = ssub.s32 %s9, 2
      // Predicated region
      $region41: #{tpu_custom_call.1} parent=39 // pred_check
        %p294 = pneg %p106
      $region42: #{tpu_custom_call.1} parent=39 // pred_check_branch
        %296 = sbr.rel (%p294) target = $region44
      $region43: #{tpu_custom_call.1} parent=39 // pred_region
        %p297 = scmp.lt.s32.totalorder %s15, 1
        %s298 = scalar_select %p297, %s15, 1
        %s299 = smul.addr %s298, 3
        %s300 = smul.addr %s299, 8
        %s301 = scalar_lea.vmem %s3, %s300
      $region44: #{tpu_custom_call.1} parent=39 // pred_fallthru
        _
    $region40: #{tpu_custom_call.1} parent=5 // pred_fallthru
      _
  $region6: #{tpu_custom_call.1} parent=0 // loop_footer
    %s13 = sadd.s32 1, %s9
  $region7: #{tpu_custom_call.1} parent=0 // loop_footer_branch
    %8 = sbr.rel target = $region3
  $region8: #{tpu_custom_call.1} parent=0 // loop_exit
    _

</llo_original>
